<compile_context>
chip_gen: v5e
topology: v5e:2x2
jax: 0.10.0
libtpu: 0.0.40
codegen_flags: <defaults>
</compile_context>

<pallas_src>
import jax
import jax.numpy as jnp
from jax.experimental import pallas as pl
from jax.experimental.pallas import tpu as pltpu


def _round_up(v, m):
    return ((v + m - 1) // m) * m


def _degree_kernel(idx_ref, dis_ref):
    """Accumulate in-degree over edge tiles; finalize to clamped deg^-1/2.

    idx_ref: (2, TE) int32  [row 0 = source j, row 1 = target i], sentinel = N_pad
    dis_ref: (N_pad, 1) f32 output, resident across the (single, "arbitrary") grid axis
    """
    e = pl.program_id(0)

    @pl.when(e == 0)
    def _():
        dis_ref[...] = jnp.zeros_like(dis_ref)

    te = idx_ref.shape[1]
    n_pad = dis_ref.shape[0]

    ei = idx_ref[1:2, :]                                            # (1, TE) targets
    iota_n = jax.lax.broadcasted_iota(jnp.int32, (n_pad, te), 0)    # (N_pad, TE)
    st = (ei == iota_n).astype(jnp.float32)                         # one-hot of targets
    dis_ref[...] += jnp.sum(st, axis=1, keepdims=True)              # partial in-degree

    @pl.when(e == pl.num_programs(0) - 1)
    def _():
        d = dis_ref[...]
        # clamp: deg == 0 -> 0 (PyG gcn_norm); avoids inf for zero-in-degree sources
        dis_ref[...] = jnp.where(d > 0.0, jax.lax.rsqrt(d), 0.0)


def _gcn_spmm_kernel(idx_ref, dis_ref, x_ref, o_ref, xs_ref):
    """out = relu( D^-1/2 * scatter_add_i( onehot_i^T @ (onehot_j @ (D^-1/2 x)) ) ).

    grid = (F tiles ["parallel"], E tiles ["arbitrary" reduction])
    idx_ref: (2, TE) int32 edge block     dis_ref: (N_pad, 1) f32 clamped deg^-1/2
    x_ref:   (N_pad, TF) f32 feature tile o_ref: (N_pad, TF) f32 (resident accumulator)
    xs_ref:  (N_pad, TF) bf16 scratch     (pre-scaled features, built once per F tile)
    """
    e = pl.program_id(1)
    te = idx_ref.shape[1]
    n_pad = x_ref.shape[0]

    @pl.when(e == 0)
    def _():
        o_ref[...] = jnp.zeros_like(o_ref)
        # hoisted out of the edge loop: source-side scaling, done once per feature tile
        xs_ref[...] = (dis_ref[...] * x_ref[...]).astype(jnp.bfloat16)

    ej = idx_ref[0:1, :]                                            # (1, TE) sources
    ei = idx_ref[1:2, :]                                            # (1, TE) targets
    iota_n = jax.lax.broadcasted_iota(jnp.int32, (n_pad, te), 0)    # (N_pad, TE)
    st = (ei == iota_n).astype(jnp.bfloat16)   # scatter one-hot (targets), exact in bf16
    pt = (ej == iota_n).astype(jnp.bfloat16)   # gather  one-hot (sources), exact in bf16

    # gather: xg[e, f] = dis[j_e] * x[j_e, f]   ((N_pad,TE)^T @ (N_pad,TF), bf16 MXU)
    xg = jax.lax.dot_general(pt, xs_ref[...], (((0,), (0,)), ((), ())),
                             preferred_element_type=jnp.float32)    # (TE, TF) f32

    # scatter-add into the resident output block ((N_pad,TE) @ (TE,TF), bf16 MXU)
    o_ref[...] += jnp.dot(st, xg.astype(jnp.bfloat16),
                          preferred_element_type=jnp.float32)

    @pl.when(e == pl.num_programs(1) - 1)
    def _():
        # target-side scaling applied once, then relu; lane-dense unmasked store
        o_ref[...] = jnp.maximum(dis_ref[...] * o_ref[...], 0.0)


def gcn_forward(x, edge_index):
    """x: (N, F) float32, edge_index: (2, E) int32 (row 0 = source, row 1 = target)."""
    x = jnp.asarray(x, jnp.float32)
    n, f = x.shape
    e = edge_index.shape[1]

    n_pad = _round_up(max(n, 1), 128)                 # sublane dim of x/out, one-hot rows
    tf = min(256, _round_up(max(f, 1), 128))          # lane-dense feature tile
    f_pad = _round_up(max(f, 1), tf)
    te = min(512, _round_up(max(e, 1), 128))          # edge (reduction) tile
    e_pad = _round_up(max(e, 1), te)

    # lane-dense (2, E_pad) edge indices; padded edges -> sentinel N_pad (all-zero one-hot)
    idx = jnp.asarray(edge_index, jnp.int32)
    idx = jnp.pad(idx, ((0, 0), (0, e_pad - e)), constant_values=n_pad)
    x_pad = jnp.pad(x, ((0, n_pad - n), (0, f_pad - f)))

    vmem_limit = 32 * 1024 * 1024  # fits v7x's 64 MiB physical with tiles chosen above

    # pass 1: clamped deg^-1/2 per node, reduced over edge tiles
    dis = pl.pallas_call(
        _degree_kernel,
        out_shape=jax.ShapeDtypeStruct((n_pad, 1), jnp.float32),
        grid=(e_pad // te,),
        in_specs=[pl.BlockSpec((2, te), lambda eb: (0, eb))],
        out_specs=pl.BlockSpec((n_pad, 1), lambda eb: (0, 0)),
        compiler_params=pltpu.CompilerParams(
            dimension_semantics=("arbitrary",),
            vmem_limit_bytes=vmem_limit),
        cost_estimate=pl.CostEstimate(
            flops=2 * e_pad * n_pad,
            transcendentals=n_pad,
            bytes_accessed=2 * e_pad * 4 + n_pad * 4),
    )(idx)

    # pass 2: normalized spmm + relu, tiled over (feature tiles, edge tiles)
    out_pad = pl.pallas_call(
        _gcn_spmm_kernel,
        out_shape=jax.ShapeDtypeStruct((n_pad, f_pad), jnp.float32),
        grid=(f_pad // tf, e_pad // te),
        in_specs=[
            pl.BlockSpec((2, te), lambda fb, eb: (0, eb)),
            pl.BlockSpec((n_pad, 1), lambda fb, eb: (0, 0)),
            pl.BlockSpec((n_pad, tf), lambda fb, eb: (0, fb)),
        ],
        out_specs=pl.BlockSpec((n_pad, tf), lambda fb, eb: (0, fb)),
        scratch_shapes=[pltpu.VMEM((n_pad, tf), jnp.bfloat16)],
        compiler_params=pltpu.CompilerParams(
            dimension_semantics=("parallel", "arbitrary"),
            vmem_limit_bytes=vmem_limit),
        cost_estimate=pl.CostEstimate(
            flops=4 * e_pad * n_pad * f_pad,
            transcendentals=0,
            bytes_accessed=2 * n_pad * f_pad * 4 + 2 * e_pad * 4 + n_pad * 4),
    )(idx, dis, x_pad)

    return out_pad[:n, :f]


def _gcn_reference(x, edge_index):
    """Pure-JAX reference matching the PyTorch module (with the deg==0 clamp)."""
    n = x.shape[0]
    ej, ei = edge_index[0], edge_index[1]
    deg = jnp.zeros((n,), jnp.float32).at[ei].add(1.0)
    dis = jnp.where(deg > 0, jax.lax.rsqrt(deg), 0.0)
    norm = dis[ej] * dis[ei]
    msg = norm[:, None] * x[ej]
    out = jnp.zeros_like(x).at[ei].add(msg)
    return jnp.maximum(out, 0.0)


if __name__ == "__main__":
    key = jax.random.PRNGKey(0)
    k_x, k_e = jax.random.split(key)

    N, F = 16, 32               # num_nodes, hidden
    num_undirected = 20         # -> E = 40 directed edges (symmetric graph)

    x = jax.random.normal(k_x, (N, F), dtype=jnp.float32)
    pairs = jax.random.randint(k_e, (2, num_undirected), 0, N, dtype=jnp.int32)
    # symmetric graph (both directions), standard GCN input; also keeps the reference
    # identical to the unclamped PyTorch formula (no zero-in-degree sources).
    edge_index = jnp.concatenate([pairs, pairs[::-1]], axis=1)   # (2, 40)

    fwd = jax.jit(gcn_forward)
    out = fwd(x, edge_index)
    jax.block_until_ready(out)

    ref = _gcn_reference(x, edge_index)
    assert out.shape == (N, F)
    assert bool(jnp.all(out >= 0.0))                                   # relu
    assert bool(jnp.allclose(out, ref, rtol=2e-2, atol=1e-2)), (
        float(jnp.max(jnp.abs(out - ref))))
    print("KERNEL_OK")
</pallas_src>

<mosaic_0001>
module attributes {stable_mosaic.version = 11 : i64} {
  func.func @_degree_kernel(%arg0: i32, %arg1: memref<2x128xi32, #tpu.memory_space<vmem>>, %arg2: memref<128x1xf32, #tpu.memory_space<vmem>>) attributes {dimension_semantics = [#tpu.dimension_semantics<arbitrary>], iteration_bounds = array<i64: 1>, scalar_prefetch = 0 : i64, scratch_operands = 0 : i64, tpu.core_type = #tpu.core_type<tc>, window_params = [{transform_indices = @transform_0, window_bounds = array<i64: 2, 128>}, {pipeline_mode = #tpu.pipeline_mode<synchronous>, transform_indices = @transform_1, window_bounds = array<i64: 128, 1>}]} {
    %c0_i32 = arith.constant 0 : i32
    %0 = arith.cmpi eq, %arg0, %c0_i32 : i32
    %1 = arith.extui %0 : i1 to i32
    %c0_i32_0 = arith.constant 0 : i32
    %2 = arith.cmpi ne, %1, %c0_i32_0 : i32
    scf.if %2 {
      %cst_7 = arith.constant 0.000000e+00 : f32
      %17 = vector.broadcast %cst_7 : f32 to vector<128x1xf32>
      %c0_8 = arith.constant 0 : index
      %c0_9 = arith.constant 0 : index
      %18 = vector.load %arg2[%c0_8, %c0_9] : memref<128x1xf32, #tpu.memory_space<vmem>>, vector<128x1xf32>
      tpu.vector_store %arg2[%c0_8, %c0_9], %17 {strides = array<i32>} : memref<128x1xf32, #tpu.memory_space<vmem>>, vector<128x1xf32>,
    } else {
    }
    %c1 = arith.constant 1 : index
    %c0 = arith.constant 0 : index
    %3 = vector.load %arg1[%c1, %c0] : memref<2x128xi32, #tpu.memory_space<vmem>>, vector<1x128xi32>
    %4 = tpu.iota {dimensions = array<i32: 0>} : vector<128x128xi32>
    %5 = vector.broadcast %3 : vector<1x128xi32> to vector<128x128xi32>
    %6 = arith.cmpi eq, %5, %4 : vector<128x128xi32>
    %7 = arith.extui %6 : vector<128x128xi1> to vector<128x128xi32>
    %8 = arith.sitofp %7 : vector<128x128xi32> to vector<128x128xf32>
    %c0_1 = arith.constant 0 : index
    %c0_2 = arith.constant 0 : index
    %9 = vector.load %arg2[%c0_1, %c0_2] : memref<128x1xf32, #tpu.memory_space<vmem>>, vector<128x1xf32>
    %cst = arith.constant dense<0.000000e+00> : vector<128xf32>
    %10 = vector.multi_reduction <add>, %8, %cst [1] : vector<128x128xf32> to vector<128xf32>
    %11 = vector.shape_cast %10 : vector<128xf32> to vector<128x1xf32>
    %12 = arith.addf %9, %11 : vector<128x1xf32>
    %c0_3 = arith.constant 0 : index
    %c0_4 = arith.constant 0 : index
    %13 = vector.load %arg2[%c0_3, %c0_4] : memref<128x1xf32, #tpu.memory_space<vmem>>, vector<128x1xf32>
    tpu.vector_store %arg2[%c0_3, %c0_4], %12 {strides = array<i32>} : memref<128x1xf32, #tpu.memory_space<vmem>>, vector<128x1xf32>,
    %c0_i32_5 = arith.constant 0 : i32
    %14 = arith.cmpi eq, %arg0, %c0_i32_5 : i32
    %15 = arith.extui %14 : i1 to i32
    %c0_i32_6 = arith.constant 0 : i32
    %16 = arith.cmpi ne, %15, %c0_i32_6 : i32
    scf.if %16 {
      %c0_7 = arith.constant 0 : index
      %c0_8 = arith.constant 0 : index
      %17 = vector.load %arg2[%c0_7, %c0_8] : memref<128x1xf32, #tpu.memory_space<vmem>>, vector<128x1xf32>
      %cst_9 = arith.constant 0.000000e+00 : f32
      %18 = vector.broadcast %cst_9 : f32 to vector<128x1xf32>
      %19 = arith.cmpf ogt, %17, %18 : vector<128x1xf32>
      %20 = math.rsqrt %17 : vector<128x1xf32>
      %cst_10 = arith.constant 0.000000e+00 : f32
      %21 = vector.broadcast %cst_10 : f32 to vector<128x1xf32>
      %22 = arith.select %19, %20, %21 : vector<128x1xi1>, vector<128x1xf32>
      %c0_11 = arith.constant 0 : index
      %c0_12 = arith.constant 0 : index
      %23 = vector.load %arg2[%c0_11, %c0_12] : memref<128x1xf32, #tpu.memory_space<vmem>>, vector<128x1xf32>
      tpu.vector_store %arg2[%c0_11, %c0_12], %22 {strides = array<i32>} : memref<128x1xf32, #tpu.memory_space<vmem>>, vector<128x1xf32>,
    } else {
    }
    return
  }
  func.func @transform_0(%arg0: i32) -> (i32, i32) {
    %c0_i32 = arith.constant 0 : i32
    %c0_i32_0 = arith.constant 0 : i32
    return %c0_i32, %arg0 : i32, i32
  }
  func.func @transform_1(%arg0: i32) -> (i32, i32) {
    %c0_i32 = arith.constant 0 : i32
    %c0_i32_0 = arith.constant 0 : i32
    %c0_i32_1 = arith.constant 0 : i32
    return %c0_i32, %c0_i32_0 : i32, i32
  }
}

module attributes {stable_mosaic.version = 11 : i64} {
  func.func @_gcn_spmm_kernel(%arg0: i32, %arg1: i32, %arg2: memref<2x128xi32, #tpu.memory_space<vmem>>, %arg3: memref<128x1xf32, #tpu.memory_space<vmem>>, %arg4: memref<128x128xf32, #tpu.memory_space<vmem>>, %arg5: memref<128x128xf32, #tpu.memory_space<vmem>>, %arg6: memref<128x128xbf16, #tpu.memory_space<vmem>>) attributes {dimension_semantics = [#tpu.dimension_semantics<parallel>, #tpu.dimension_semantics<arbitrary>], iteration_bounds = array<i64: 1, 1>, scalar_prefetch = 0 : i64, scratch_operands = 1 : i64, tpu.core_type = #tpu.core_type<tc>, window_params = [{transform_indices = @transform_0, window_bounds = array<i64: 2, 128>}, {pipeline_mode = #tpu.pipeline_mode<synchronous>, transform_indices = @transform_1, window_bounds = array<i64: 128, 1>}, {transform_indices = @transform_2, window_bounds = array<i64: 128, 128>}, {transform_indices = @transform_3, window_bounds = array<i64: 128, 128>}]} {
    %c0_i32 = arith.constant 0 : i32
    %0 = arith.cmpi eq, %arg1, %c0_i32 : i32
    %1 = arith.extui %0 : i1 to i32
    %c0_i32_0 = arith.constant 0 : i32
    %2 = arith.cmpi ne, %1, %c0_i32_0 : i32
    scf.if %2 {
      %cst_12 = arith.constant 0.000000e+00 : f32
      %26 = vector.broadcast %cst_12 : f32 to vector<128x128xf32>
      %c0_13 = arith.constant 0 : index
      %c0_14 = arith.constant 0 : index
      %27 = vector.load %arg5[%c0_13, %c0_14] : memref<128x128xf32, #tpu.memory_space<vmem>>, vector<128x128xf32>
      tpu.vector_store %arg5[%c0_13, %c0_14], %26 {strides = array<i32>} : memref<128x128xf32, #tpu.memory_space<vmem>>, vector<128x128xf32>,
      %c0_15 = arith.constant 0 : index
      %c0_16 = arith.constant 0 : index
      %28 = vector.load %arg3[%c0_15, %c0_16] : memref<128x1xf32, #tpu.memory_space<vmem>>, vector<128x1xf32>
      %c0_17 = arith.constant 0 : index
      %c0_18 = arith.constant 0 : index
      %29 = vector.load %arg4[%c0_17, %c0_18] : memref<128x128xf32, #tpu.memory_space<vmem>>, vector<128x128xf32>
      %30 = vector.broadcast %28 : vector<128x1xf32> to vector<128x128xf32>
      %31 = arith.mulf %30, %29 : vector<128x128xf32>
      %32 = arith.truncf %31 : vector<128x128xf32> to vector<128x128xbf16>
      %c0_19 = arith.constant 0 : index
      %c0_20 = arith.constant 0 : index
      %33 = vector.load %arg6[%c0_19, %c0_20] : memref<128x128xbf16, #tpu.memory_space<vmem>>, vector<128x128xbf16>
      tpu.vector_store %arg6[%c0_19, %c0_20], %32 {strides = array<i32>} : memref<128x128xbf16, #tpu.memory_space<vmem>>, vector<128x128xbf16>,
    } else {
    }
    %c0 = arith.constant 0 : index
    %c0_1 = arith.constant 0 : index
    %3 = vector.load %arg2[%c0, %c0_1] : memref<2x128xi32, #tpu.memory_space<vmem>>, vector<1x128xi32>
    %c1 = arith.constant 1 : index
    %c0_2 = arith.constant 0 : index
    %4 = vector.load %arg2[%c1, %c0_2] : memref<2x128xi32, #tpu.memory_space<vmem>>, vector<1x128xi32>
    %5 = tpu.iota {dimensions = array<i32: 0>} : vector<128x128xi32>
    %6 = vector.broadcast %4 : vector<1x128xi32> to vector<128x128xi32>
    %7 = arith.cmpi eq, %6, %5 : vector<128x128xi32>
    %8 = arith.extui %7 : vector<128x128xi1> to vector<128x128xi32>
    %9 = arith.sitofp %8 : vector<128x128xi32> to vector<128x128xf32>
    %10 = arith.truncf %9 : vector<128x128xf32> to vector<128x128xbf16>
    %11 = vector.broadcast %3 : vector<1x128xi32> to vector<128x128xi32>
    %12 = arith.cmpi eq, %11, %5 : vector<128x128xi32>
    %13 = arith.extui %12 : vector<128x128xi1> to vector<128x128xi32>
    %14 = arith.sitofp %13 : vector<128x128xi32> to vector<128x128xf32>
    %15 = arith.truncf %14 : vector<128x128xf32> to vector<128x128xbf16>
    %c0_3 = arith.constant 0 : index
    %c0_4 = arith.constant 0 : index
    %16 = vector.load %arg6[%c0_3, %c0_4] : memref<128x128xbf16, #tpu.memory_space<vmem>>, vector<128x128xbf16>
    %cst = arith.constant dense<0.000000e+00> : vector<128x128xf32>
    %17 = tpu.matmul %15, %16, %cst {dimension_numbers = #tpu.dot_dimension_numbers<[0], [0], [1], [1], [0, 1, 1, 1], [], []>} : vector<128x128xbf16>, vector<128x128xbf16>, vector<128x128xf32> -> vector<128x128xf32>
    %c0_5 = arith.constant 0 : index
    %c0_6 = arith.constant 0 : index
    %18 = vector.load %arg5[%c0_5, %c0_6] : memref<128x128xf32, #tpu.memory_space<vmem>>, vector<128x128xf32>
    %19 = arith.truncf %17 : vector<128x128xf32> to vector<128x128xbf16>
    %cst_7 = arith.constant dense<0.000000e+00> : vector<128x128xf32>
    %20 = tpu.matmul %10, %19, %cst_7 {dimension_numbers = #tpu.dot_dimension_numbers<[1], [0], [0], [1], [0, 0, 1, 1], [], []>} : vector<128x128xbf16>, vector<128x128xbf16>, vector<128x128xf32> -> vector<128x128xf32>
    %21 = arith.addf %18, %20 : vector<128x128xf32>
    %c0_8 = arith.constant 0 : index
    %c0_9 = arith.constant 0 : index
    %22 = vector.load %arg5[%c0_8, %c0_9] : memref<128x128xf32, #tpu.memory_space<vmem>>, vector<128x128xf32>
    tpu.vector_store %arg5[%c0_8, %c0_9], %21 {strides = array<i32>} : memref<128x128xf32, #tpu.memory_space<vmem>>, vector<128x128xf32>,
    %c0_i32_10 = arith.constant 0 : i32
    %23 = arith.cmpi eq, %arg1, %c0_i32_10 : i32
    %24 = arith.extui %23 : i1 to i32
    %c0_i32_11 = arith.constant 0 : i32
    %25 = arith.cmpi ne, %24, %c0_i32_11 : i32
    scf.if %25 {
      %c0_12 = arith.constant 0 : index
      %c0_13 = arith.constant 0 : index
      %26 = vector.load %arg3[%c0_12, %c0_13] : memref<128x1xf32, #tpu.memory_space<vmem>>, vector<128x1xf32>
      %c0_14 = arith.constant 0 : index
      %c0_15 = arith.constant 0 : index
      %27 = vector.load %arg5[%c0_14, %c0_15] : memref<128x128xf32, #tpu.memory_space<vmem>>, vector<128x128xf32>
      %28 = vector.broadcast %26 : vector<128x1xf32> to vector<128x128xf32>
      %29 = arith.mulf %28, %27 : vector<128x128xf32>
      %cst_16 = arith.constant 0.000000e+00 : f32
      %30 = vector.broadcast %cst_16 : f32 to vector<128x128xf32>
      %31 = arith.maximumf %29, %30 : vector<128x128xf32>
      %c0_17 = arith.constant 0 : index
      %c0_18 = arith.constant 0 : index
      %32 = vector.load %arg5[%c0_17, %c0_18] : memref<128x128xf32, #tpu.memory_space<vmem>>, vector<128x128xf32>
      tpu.vector_store %arg5[%c0_17, %c0_18], %31 {strides = array<i32>} : memref<128x128xf32, #tpu.memory_space<vmem>>, vector<128x128xf32>,
    } else {
    }
    return
  }
  func.func @transform_0(%arg0: i32, %arg1: i32) -> (i32, i32) {
    %c0_i32 = arith.constant 0 : i32
    %c0_i32_0 = arith.constant 0 : i32
    return %c0_i32, %arg1 : i32, i32
  }
  func.func @transform_1(%arg0: i32, %arg1: i32) -> (i32, i32) {
    %c0_i32 = arith.constant 0 : i32
    %c0_i32_0 = arith.constant 0 : i32
    %c0_i32_1 = arith.constant 0 : i32
    return %c0_i32, %c0_i32_0 : i32, i32
  }
  func.func @transform_2(%arg0: i32, %arg1: i32) -> (i32, i32) {
    %c0_i32 = arith.constant 0 : i32
    %c0_i32_0 = arith.constant 0 : i32
    return %c0_i32, %arg0 : i32, i32
  }
  func.func @transform_3(%arg0: i32, %arg1: i32) -> (i32, i32) {
    %c0_i32 = arith.constant 0 : i32
    %c0_i32_0 = arith.constant 0 : i32
    return %c0_i32, %arg0 : i32, i32
  }
}

</mosaic_0001>

<llo_original>
// kernel: gcn_forward.2
$region0: #{gcn_forward.2}
  #allocation0 [shape = 'u32[]', space=smem, size = 0x4, offset = 0x4, fixed_abs, tag = 'smem constant byte address 0x4 - core index']
  #allocation1 [shape = 'u32[72,128]{1,0:T(1,128)}', space=vmem, size = 0x9000, scoped, tag = 'internal scratch']
  %s0 = inlined_call_operand.vmem [shape: s32[2,128], index: 0, kind: input, shape index: {}]
  %s1 = inlined_call_operand.vmem [shape: f32[128,1], index: 1, kind: output, shape index: {}]
  %s2 = sld [smem:[#allocation0]]
  $region22: #{gcn_forward.2} parent=0
    _
  %s4 = ssub.s32 1, %s2
  %s5 = scalar_select 0, %s4, %s2
  // Predicated region
  $region2: #{gcn_forward.2} parent=0 // pred_check
    _
  $region3: #{gcn_forward.2} parent=0 // pred_check_branch
    %7 = sbr.rel (0) target = $region5
  $region4: #{gcn_forward.2} parent=0 // pred_region
    _
  $region5: #{gcn_forward.2} parent=0 // pred_fallthru
    _
  %p8 = scmp.eq.s32.totalorder 0, 0
  // Predicated region
  $region6: #{gcn_forward.2} parent=0 // pred_check
    %p9 = pneg %p8
  $region7: #{gcn_forward.2} parent=0 // pred_check_branch
    %11 = sbr.rel (%p9) target = $region9
  $region8: #{gcn_forward.2} parent=0 // pred_region
    %vm12 = vcmask 7168
    %13 = vst.msk [vmem:[%s1] sm:$0xff] %vm12, 0.0
    %14 = vst.msk [vmem:[%s1 + $0x8] sm:$0xff] %vm12, 0.0
    %15 = vst.msk [vmem:[%s1 + $0x10] sm:$0xff] %vm12, 0.0
    %16 = vst.msk [vmem:[%s1 + $0x18] sm:$0xff] %vm12, 0.0
    %17 = vst.msk [vmem:[%s1 + $0x20] sm:$0xff] %vm12, 0.0
    %18 = vst.msk [vmem:[%s1 + $0x28] sm:$0xff] %vm12, 0.0
    %19 = vst.msk [vmem:[%s1 + $0x30] sm:$0xff] %vm12, 0.0
    %20 = vst.msk [vmem:[%s1 + $0x38] sm:$0xff] %vm12, 0.0
    %21 = vst.msk [vmem:[%s1 + $0x40] sm:$0xff] %vm12, 0.0
    %22 = vst.msk [vmem:[%s1 + $0x48] sm:$0xff] %vm12, 0.0
    %23 = vst.msk [vmem:[%s1 + $0x50] sm:$0xff] %vm12, 0.0
    %24 = vst.msk [vmem:[%s1 + $0x58] sm:$0xff] %vm12, 0.0
    %25 = vst.msk [vmem:[%s1 + $0x60] sm:$0xff] %vm12, 0.0
    %26 = vst.msk [vmem:[%s1 + $0x68] sm:$0xff] %vm12, 0.0
    %27 = vst.msk [vmem:[%s1 + $0x70] sm:$0xff] %vm12, 0.0
    %28 = vst.msk [vmem:[%s1 + $0x78] sm:$0xff] %vm12, 0.0
  $region9: #{gcn_forward.2} parent=0 // pred_fallthru
    _
  %v29 = vld [vmem:[%s0 + $0x1] sm:$0x1]
  %v30 = vlaneseq
  %v31 = vshrl.u32 %v30, 7
  %v32 = vadd.s32 %v31, 8
  %v33 = vadd.s32 %v31, 16
  %v34 = vadd.s32 %v31, 24
  %v35 = vadd.s32 %v31, 32
  %v36 = vadd.s32 %v31, 40
  %v37 = vadd.s32 %v31, 48
  %v38 = vadd.s32 %v31, 56
  %v39 = vadd.s32 %v31, 64
  %v40 = vadd.s32 %v31, 72
  %v41 = vadd.s32 %v31, 80
  %v42 = vadd.s32 %v31, 88
  %v43 = vadd.s32 %v31, 96
  %v44 = vadd.s32 %v31, 104
  %v45 = vadd.s32 %v31, 112
  %v46 = vadd.s32 %v31, 120
  %v47 = vperm.slane %v29, 0
  %vm48 = vcmp.eq.s32.totalorder %v47, %v31
  %vm49 = vcmp.eq.s32.totalorder %v47, %v32
  %vm50 = vcmp.eq.s32.totalorder %v47, %v33
  %vm51 = vcmp.eq.s32.totalorder %v47, %v34
  %vm52 = vcmp.eq.s32.totalorder %v47, %v35
  %vm53 = vcmp.eq.s32.totalorder %v47, %v36
  %vm54 = vcmp.eq.s32.totalorder %v47, %v37
  %vm55 = vcmp.eq.s32.totalorder %v47, %v38
  %vm56 = vcmp.eq.s32.totalorder %v47, %v39
  %vm57 = vcmp.eq.s32.totalorder %v47, %v40
  %vm58 = vcmp.eq.s32.totalorder %v47, %v41
  %vm59 = vcmp.eq.s32.totalorder %v47, %v42
  %vm60 = vcmp.eq.s32.totalorder %v47, %v43
  %vm61 = vcmp.eq.s32.totalorder %v47, %v44
  %vm62 = vcmp.eq.s32.totalorder %v47, %v45
  %vm63 = vcmp.eq.s32.totalorder %v47, %v46
  %v64 = vsel %vm48, 1, 0
  %v65 = vsel %vm49, 1, 0
  %v66 = vsel %vm50, 1, 0
  %v67 = vsel %vm51, 1, 0
  %v68 = vsel %vm52, 1, 0
  %v69 = vsel %vm53, 1, 0
  %v70 = vsel %vm54, 1, 0
  %v71 = vsel %vm55, 1, 0
  %v72 = vsel %vm56, 1, 0
  %v73 = vsel %vm57, 1, 0
  %v74 = vsel %vm58, 1, 0
  %v75 = vsel %vm59, 1, 0
  %v76 = vsel %vm60, 1, 0
  %v77 = vsel %vm61, 1, 0
  %v78 = vsel %vm62, 1, 0
  %v79 = vsel %vm63, 1, 0
  %v80 = vcvt.s32.f32 %v64
  %v81 = vcvt.s32.f32 %v65
  %v82 = vcvt.s32.f32 %v66
  %v83 = vcvt.s32.f32 %v67
  %v84 = vcvt.s32.f32 %v68
  %v85 = vcvt.s32.f32 %v69
  %v86 = vcvt.s32.f32 %v70
  %v87 = vcvt.s32.f32 %v71
  %v88 = vcvt.s32.f32 %v72
  %v89 = vcvt.s32.f32 %v73
  %v90 = vcvt.s32.f32 %v74
  %v91 = vcvt.s32.f32 %v75
  %v92 = vcvt.s32.f32 %v76
  %v93 = vcvt.s32.f32 %v77
  %v94 = vcvt.s32.f32 %v78
  %v95 = vcvt.s32.f32 %v79
  %v96 = vld [vmem:[%s1] sm:$0xff]
  %v97 = vld [vmem:[%s1 + $0x8] sm:$0xff]
  %v98 = vld [vmem:[%s1 + $0x10] sm:$0xff]
  %v99 = vld [vmem:[%s1 + $0x18] sm:$0xff]
  %v100 = vld [vmem:[%s1 + $0x20] sm:$0xff]
  %v101 = vld [vmem:[%s1 + $0x28] sm:$0xff]
  %v102 = vld [vmem:[%s1 + $0x30] sm:$0xff]
  %v103 = vld [vmem:[%s1 + $0x38] sm:$0xff]
  %v104 = vld [vmem:[%s1 + $0x40] sm:$0xff]
  %v105 = vld [vmem:[%s1 + $0x48] sm:$0xff]
  %v106 = vld [vmem:[%s1 + $0x50] sm:$0xff]
  %v107 = vld [vmem:[%s1 + $0x58] sm:$0xff]
  %v108 = vld [vmem:[%s1 + $0x60] sm:$0xff]
  %v109 = vld [vmem:[%s1 + $0x68] sm:$0xff]
  %v110 = vld [vmem:[%s1 + $0x70] sm:$0xff]
  %v111 = vld [vmem:[%s1 + $0x78] sm:$0xff]
  %112 = vadd.xlane.f32.xlu0 %v80
  %v113 = vpop.xlane.xlu0 %112
  %114 = vadd.xlane.f32.xlu0 %v81
  %v115 = vpop.xlane.xlu0 %114
  %116 = vadd.xlane.f32.xlu0 %v82
  %v117 = vpop.xlane.xlu0 %116
  %118 = vadd.xlane.f32.xlu0 %v83
  %v119 = vpop.xlane.xlu0 %118
  %120 = vadd.xlane.f32.xlu0 %v84
  %v121 = vpop.xlane.xlu0 %120
  %122 = vadd.xlane.f32.xlu0 %v85
  %v123 = vpop.xlane.xlu0 %122
  %124 = vadd.xlane.f32.xlu0 %v86
  %v125 = vpop.xlane.xlu0 %124
  %126 = vadd.xlane.f32.xlu0 %v87
  %v127 = vpop.xlane.xlu0 %126
  %128 = vadd.xlane.f32.xlu0 %v88
  %v129 = vpop.xlane.xlu0 %128
  %130 = vadd.xlane.f32.xlu0 %v89
  %v131 = vpop.xlane.xlu0 %130
  %132 = vadd.xlane.f32.xlu0 %v90
  %v133 = vpop.xlane.xlu0 %132
  %134 = vadd.xlane.f32.xlu0 %v91
  %v135 = vpop.xlane.xlu0 %134
  %136 = vadd.xlane.f32.xlu0 %v92
  %v137 = vpop.xlane.xlu0 %136
  %138 = vadd.xlane.f32.xlu0 %v93
  %v139 = vpop.xlane.xlu0 %138
  %140 = vadd.xlane.f32.xlu0 %v94
  %v141 = vpop.xlane.xlu0 %140
  %142 = vadd.xlane.f32.xlu0 %v95
  %v143 = vpop.xlane.xlu0 %142
  %v144 = vadd.f32 %v96, %v113
  %v145 = vadd.f32 %v97, %v115
  %v146 = vadd.f32 %v98, %v117
  %v147 = vadd.f32 %v99, %v119
  %v148 = vadd.f32 %v100, %v121
  %v149 = vadd.f32 %v101, %v123
  %v150 = vadd.f32 %v102, %v125
  %v151 = vadd.f32 %v103, %v127
  %v152 = vadd.f32 %v104, %v129
  %v153 = vadd.f32 %v105, %v131
  %v154 = vadd.f32 %v106, %v133
  %v155 = vadd.f32 %v107, %v135
  %v156 = vadd.f32 %v108, %v137
  %v157 = vadd.f32 %v109, %v139
  %v158 = vadd.f32 %v110, %v141
  %v159 = vadd.f32 %v111, %v143
  %vm160 = vcmask 7168
  %161 = vst.msk [vmem:[%s1] sm:$0xff] %vm160, %v144
  %162 = vst.msk [vmem:[%s1 + $0x8] sm:$0xff] %vm160, %v145
  %163 = vst.msk [vmem:[%s1 + $0x10] sm:$0xff] %vm160, %v146
  %164 = vst.msk [vmem:[%s1 + $0x18] sm:$0xff] %vm160, %v147
  %165 = vst.msk [vmem:[%s1 + $0x20] sm:$0xff] %vm160, %v148
  %166 = vst.msk [vmem:[%s1 + $0x28] sm:$0xff] %vm160, %v149
  %167 = vst.msk [vmem:[%s1 + $0x30] sm:$0xff] %vm160, %v150
  %168 = vst.msk [vmem:[%s1 + $0x38] sm:$0xff] %vm160, %v151
  %169 = vst.msk [vmem:[%s1 + $0x40] sm:$0xff] %vm160, %v152
  %170 = vst.msk [vmem:[%s1 + $0x48] sm:$0xff] %vm160, %v153
  %171 = vst.msk [vmem:[%s1 + $0x50] sm:$0xff] %vm160, %v154
  %172 = vst.msk [vmem:[%s1 + $0x58] sm:$0xff] %vm160, %v155
  %173 = vst.msk [vmem:[%s1 + $0x60] sm:$0xff] %vm160, %v156
  %174 = vst.msk [vmem:[%s1 + $0x68] sm:$0xff] %vm160, %v157
  %175 = vst.msk [vmem:[%s1 + $0x70] sm:$0xff] %vm160, %v158
  %176 = vst.msk [vmem:[%s1 + $0x78] sm:$0xff] %vm160, %v159
  // Predicated region
  $region10: #{gcn_forward.2} parent=0 // pred_check
    %p177 = pneg %p8
  $region11: #{gcn_forward.2} parent=0 // pred_check_branch
    %179 = sbr.rel (%p177) target = $region13
  $region12: #{gcn_forward.2} parent=0 // pred_region
    %v180 = vld [vmem:[%s1] sm:$0xff]
    %v181 = vld [vmem:[%s1 + $0x8] sm:$0xff]
    %v182 = vld [vmem:[%s1 + $0x10] sm:$0xff]
    %v183 = vld [vmem:[%s1 + $0x18] sm:$0xff]
    %v184 = vld [vmem:[%s1 + $0x20] sm:$0xff]
    %v185 = vld [vmem:[%s1 + $0x28] sm:$0xff]
    %v186 = vld [vmem:[%s1 + $0x30] sm:$0xff]
    %v187 = vld [vmem:[%s1 + $0x38] sm:$0xff]
    %v188 = vld [vmem:[%s1 + $0x40] sm:$0xff]
    %v189 = vld [vmem:[%s1 + $0x48] sm:$0xff]
    %v190 = vld [vmem:[%s1 + $0x50] sm:$0xff]
    %v191 = vld [vmem:[%s1 + $0x58] sm:$0xff]
    %v192 = vld [vmem:[%s1 + $0x60] sm:$0xff]
    %v193 = vld [vmem:[%s1 + $0x68] sm:$0xff]
    %v194 = vld [vmem:[%s1 + $0x70] sm:$0xff]
    %v195 = vld [vmem:[%s1 + $0x78] sm:$0xff]
    %vm196 = vcmp.gt.f32.partialorder %v180, 0.0
    %vm197 = vcmp.gt.f32.partialorder %v181, 0.0
    %vm198 = vcmp.gt.f32.partialorder %v182, 0.0
    %vm199 = vcmp.gt.f32.partialorder %v183, 0.0
    %vm200 = vcmp.gt.f32.partialorder %v184, 0.0
    %vm201 = vcmp.gt.f32.partialorder %v185, 0.0
    %vm202 = vcmp.gt.f32.partialorder %v186, 0.0
    %vm203 = vcmp.gt.f32.partialorder %v187, 0.0
    %vm204 = vcmp.gt.f32.partialorder %v188, 0.0
    %vm205 = vcmp.gt.f32.partialorder %v189, 0.0
    %vm206 = vcmp.gt.f32.partialorder %v190, 0.0
    %vm207 = vcmp.gt.f32.partialorder %v191, 0.0
    %vm208 = vcmp.gt.f32.partialorder %v192, 0.0
    %vm209 = vcmp.gt.f32.partialorder %v193, 0.0
    %vm210 = vcmp.gt.f32.partialorder %v194, 0.0
    %vm211 = vcmp.gt.f32.partialorder %v195, 0.0
    %v212 = vrsqrt.pop %v180
    %v213 = vmul.f32 %v212, %v180
    %v214 = vmul.f32 %v213, %v212
    %v215 = vmul.f32 0.5, %v214
    %v216 = vsub.f32 1.5, %v215
    %v217 = vmul.f32 %v212, %v216
    %vm218 = vweird.f32 %v180
    %vm219 = vweird.f32 %v212
    %vm220 = vmor %vm218, %vm219
    %v221 = vsel %vm220, %v212, %v217
    %v222 = vrsqrt.pop %v181
    %v223 = vmul.f32 %v222, %v181
    %v224 = vmul.f32 %v223, %v222
    %v225 = vmul.f32 0.5, %v224
    %v226 = vsub.f32 1.5, %v225
    %v227 = vmul.f32 %v222, %v226
    %vm228 = vweird.f32 %v181
    %vm229 = vweird.f32 %v222
    %vm230 = vmor %vm228, %vm229
    %v231 = vsel %vm230, %v222, %v227
    %v232 = vrsqrt.pop %v182
    %v233 = vmul.f32 %v232, %v182
    %v234 = vmul.f32 %v233, %v232
    %v235 = vmul.f32 0.5, %v234
    %v236 = vsub.f32 1.5, %v235
    %v237 = vmul.f32 %v232, %v236
    %vm238 = vweird.f32 %v182
    %vm239 = vweird.f32 %v232
    %vm240 = vmor %vm238, %vm239
    %v241 = vsel %vm240, %v232, %v237
    %v242 = vrsqrt.pop %v183
    %v243 = vmul.f32 %v242, %v183
    %v244 = vmul.f32 %v243, %v242
    %v245 = vmul.f32 0.5, %v244
    %v246 = vsub.f32 1.5, %v245
    %v247 = vmul.f32 %v242, %v246
    %vm248 = vweird.f32 %v183
    %vm249 = vweird.f32 %v242
    %vm250 = vmor %vm248, %vm249
    %v251 = vsel %vm250, %v242, %v247
    %v252 = vrsqrt.pop %v184
    %v253 = vmul.f32 %v252, %v184
    %v254 = vmul.f32 %v253, %v252
    %v255 = vmul.f32 0.5, %v254
    %v256 = vsub.f32 1.5, %v255
    %v257 = vmul.f32 %v252, %v256
    %vm258 = vweird.f32 %v184
    %vm259 = vweird.f32 %v252
    %vm260 = vmor %vm258, %vm259
    %v261 = vsel %vm260, %v252, %v257
    %v262 = vrsqrt.pop %v185
    %v263 = vmul.f32 %v262, %v185
    %v264 = vmul.f32 %v263, %v262
    %v265 = vmul.f32 0.5, %v264
    %v266 = vsub.f32 1.5, %v265
    %v267 = vmul.f32 %v262, %v266
    %vm268 = vweird.f32 %v185
    %vm269 = vweird.f32 %v262
    %vm270 = vmor %vm268, %vm269
    %v271 = vsel %vm270, %v262, %v267
    %v272 = vrsqrt.pop %v186
    %v273 = vmul.f32 %v272, %v186
    %v274 = vmul.f32 %v273, %v272
    %v275 = vmul.f32 0.5, %v274
    %v276 = vsub.f32 1.5, %v275
    %v277 = vmul.f32 %v272, %v276
    %vm278 = vweird.f32 %v186
    %vm279 = vweird.f32 %v272
    %vm280 = vmor %vm278, %vm279
    %v281 = vsel %vm280, %v272, %v277
    %v282 = vrsqrt.pop %v187
    %v283 = vmul.f32 %v282, %v187
    %v284 = vmul.f32 %v283, %v282
    %v285 = vmul.f32 0.5, %v284
    %v286 = vsub.f32 1.5, %v285
    %v287 = vmul.f32 %v282, %v286
    %vm288 = vweird.f32 %v187
    %vm289 = vweird.f32 %v282
    %vm290 = vmor %vm288, %vm289
    %v291 = vsel %vm290, %v282, %v287
    %v292 = vrsqrt.pop %v188
    %v293 = vmul.f32 %v292, %v188
    %v294 = vmul.f32 %v293, %v292
    %v295 = vmul.f32 0.5, %v294
    %v296 = vsub.f32 1.5, %v295
    %v297 = vmul.f32 %v292, %v296
    %vm298 = vweird.f32 %v188
    %vm299 = vweird.f32 %v292
    %vm300 = vmor %vm298, %vm299
    %v301 = vsel %vm300, %v292, %v297
    %v302 = vrsqrt.pop %v189
    %v303 = vmul.f32 %v302, %v189
    %v304 = vmul.f32 %v303, %v302
    %v305 = vmul.f32 0.5, %v304
    %v306 = vsub.f32 1.5, %v305
    %v307 = vmul.f32 %v302, %v306
    %vm308 = vweird.f32 %v189
    %vm309 = vweird.f32 %v302
    %vm310 = vmor %vm308, %vm309
    %v311 = vsel %vm310, %v302, %v307
    %v312 = vrsqrt.pop %v190
    %v313 = vmul.f32 %v312, %v190
    %v314 = vmul.f32 %v313, %v312
    %v315 = vmul.f32 0.5, %v314
    %v316 = vsub.f32 1.5, %v315
    %v317 = vmul.f32 %v312, %v316
    %vm318 = vweird.f32 %v190
    %vm319 = vweird.f32 %v312
    %vm320 = vmor %vm318, %vm319
    %v321 = vsel %vm320, %v312, %v317
    %v322 = vrsqrt.pop %v191
    %v323 = vmul.f32 %v322, %v191
    %v324 = vmul.f32 %v323, %v322
    %v325 = vmul.f32 0.5, %v324
    %v326 = vsub.f32 1.5, %v325
    %v327 = vmul.f32 %v322, %v326
    %vm328 = vweird.f32 %v191
    %vm329 = vweird.f32 %v322
    %vm330 = vmor %vm328, %vm329
    %v331 = vsel %vm330, %v322, %v327
    %v332 = vrsqrt.pop %v192
    %v333 = vmul.f32 %v332, %v192
    %v334 = vmul.f32 %v333, %v332
    %v335 = vmul.f32 0.5, %v334
    %v336 = vsub.f32 1.5, %v335
    %v337 = vmul.f32 %v332, %v336
    %vm338 = vweird.f32 %v192
    %vm339 = vweird.f32 %v332
    %vm340 = vmor %vm338, %vm339
    %v341 = vsel %vm340, %v332, %v337
    %v342 = vrsqrt.pop %v193
    %v343 = vmul.f32 %v342, %v193
    %v344 = vmul.f32 %v343, %v342
    %v345 = vmul.f32 0.5, %v344
    %v346 = vsub.f32 1.5, %v345
    %v347 = vmul.f32 %v342, %v346
    %vm348 = vweird.f32 %v193
    %vm349 = vweird.f32 %v342
    %vm350 = vmor %vm348, %vm349
    %v351 = vsel %vm350, %v342, %v347
    %v352 = vrsqrt.pop %v194
    %v353 = vmul.f32 %v352, %v194
    %v354 = vmul.f32 %v353, %v352
    %v355 = vmul.f32 0.5, %v354
    %v356 = vsub.f32 1.5, %v355
    %v357 = vmul.f32 %v352, %v356
    %vm358 = vweird.f32 %v194
    %vm359 = vweird.f32 %v352
    %vm360 = vmor %vm358, %vm359
    %v361 = vsel %vm360, %v352, %v357
    %v362 = vrsqrt.pop %v195
    %v363 = vmul.f32 %v362, %v195
    %v364 = vmul.f32 %v363, %v362
    %v365 = vmul.f32 0.5, %v364
    %v366 = vsub.f32 1.5, %v365
    %v367 = vmul.f32 %v362, %v366
    %vm368 = vweird.f32 %v195
    %vm369 = vweird.f32 %v362
    %vm370 = vmor %vm368, %vm369
    %v371 = vsel %vm370, %v362, %v367
    %v372 = vsel %vm196, %v221, 0.0
    %v373 = vsel %vm197, %v231, 0.0
    %v374 = vsel %vm198, %v241, 0.0
    %v375 = vsel %vm199, %v251, 0.0
    %v376 = vsel %vm200, %v261, 0.0
    %v377 = vsel %vm201, %v271, 0.0
    %v378 = vsel %vm202, %v281, 0.0
    %v379 = vsel %vm203, %v291, 0.0
    %v380 = vsel %vm204, %v301, 0.0
    %v381 = vsel %vm205, %v311, 0.0
    %v382 = vsel %vm206, %v321, 0.0
    %v383 = vsel %vm207, %v331, 0.0
    %v384 = vsel %vm208, %v341, 0.0
    %v385 = vsel %vm209, %v351, 0.0
    %v386 = vsel %vm210, %v361, 0.0
    %v387 = vsel %vm211, %v371, 0.0
    %388 = vst.msk [vmem:[%s1] sm:$0xff] %vm160, %v372
    %389 = vst.msk [vmem:[%s1 + $0x8] sm:$0xff] %vm160, %v373
    %390 = vst.msk [vmem:[%s1 + $0x10] sm:$0xff] %vm160, %v374
    %391 = vst.msk [vmem:[%s1 + $0x18] sm:$0xff] %vm160, %v375
    %392 = vst.msk [vmem:[%s1 + $0x20] sm:$0xff] %vm160, %v376
    %393 = vst.msk [vmem:[%s1 + $0x28] sm:$0xff] %vm160, %v377
    %394 = vst.msk [vmem:[%s1 + $0x30] sm:$0xff] %vm160, %v378
    %395 = vst.msk [vmem:[%s1 + $0x38] sm:$0xff] %vm160, %v379
    %396 = vst.msk [vmem:[%s1 + $0x40] sm:$0xff] %vm160, %v380
    %397 = vst.msk [vmem:[%s1 + $0x48] sm:$0xff] %vm160, %v381
    %398 = vst.msk [vmem:[%s1 + $0x50] sm:$0xff] %vm160, %v382
    %399 = vst.msk [vmem:[%s1 + $0x58] sm:$0xff] %vm160, %v383
    %400 = vst.msk [vmem:[%s1 + $0x60] sm:$0xff] %vm160, %v384
    %401 = vst.msk [vmem:[%s1 + $0x68] sm:$0xff] %vm160, %v385
    %402 = vst.msk [vmem:[%s1 + $0x70] sm:$0xff] %vm160, %v386
    %403 = vst.msk [vmem:[%s1 + $0x78] sm:$0xff] %vm160, %v387
  $region13: #{gcn_forward.2} parent=0 // pred_fallthru
    _
  // Predicated region
  $region14: #{gcn_forward.2} parent=0 // pred_check
    _
  $region15: #{gcn_forward.2} parent=0 // pred_check_branch
    %405 = sbr.rel (0) target = $region17
  $region16: #{gcn_forward.2} parent=0 // pred_region
    _
  $region17: #{gcn_forward.2} parent=0 // pred_fallthru
    _
  // Predicated region
  $region18: #{gcn_forward.2} parent=0 // pred_check
    _
  $region19: #{gcn_forward.2} parent=0 // pred_check_branch
    %407 = sbr.rel (0) target = $region21
  $region20: #{gcn_forward.2} parent=0 // pred_region
    _
  $region21: #{gcn_forward.2} parent=0 // pred_fallthru
    _

// kernel: gcn_forward.3
$region0: #{gcn_forward.3}
  #allocation0 [shape = 'u32[]', space=smem, size = 0x4, offset = 0x4, fixed_abs, tag = 'smem constant byte address 0x4 - core index']
  #allocation1 [shape = 'u32[72,128]{1,0:T(1,128)}', space=vmem, size = 0x9000, scoped, tag = 'internal scratch']
  #allocation2 [shape = 'bf16[128,128]{1,0:T(8,128)(2,1)}', space=vmem, size = 0x8000, scoped, tag = 'scratch operand']
  %s0 = inlined_call_operand.vmem [shape: s32[2,128], index: 0, kind: input, shape index: {}]
  %s1 = inlined_call_operand.vmem [shape: f32[128,1], index: 1, kind: input, shape index: {}]
  %s2 = inlined_call_operand.vmem [shape: f32[128,128], index: 2, kind: input, shape index: {}]
  %s3 = inlined_call_operand.vmem [shape: f32[128,128], index: 3, kind: output, shape index: {}]
  %s4 = sld [smem:[#allocation0]]
  $region30: #{gcn_forward.3} parent=0
    _
  %s6 = ssub.s32 1, %s4
  %s7 = scalar_select 0, %s6, %s4
  // Predicated region
  $region2: #{gcn_forward.3} parent=0 // pred_check
    _
  $region3: #{gcn_forward.3} parent=0 // pred_check_branch
    %9 = sbr.rel (0) target = $region5
  $region4: #{gcn_forward.3} parent=0 // pred_region
    _
  $region5: #{gcn_forward.3} parent=0 // pred_fallthru
    _
  // Predicated region
  $region6: #{gcn_forward.3} parent=0 // pred_check
    _
  $region7: #{gcn_forward.3} parent=0 // pred_check_branch
    %11 = sbr.rel (0) target = $region9
  $region8: #{gcn_forward.3} parent=0 // pred_region
    _
  $region9: #{gcn_forward.3} parent=0 // pred_fallthru
    _
  // Predicated region
  $region10: #{gcn_forward.3} parent=0 // pred_check
    _
  $region11: #{gcn_forward.3} parent=0 // pred_check_branch
    %13 = sbr.rel (0) target = $region13
  $region12: #{gcn_forward.3} parent=0 // pred_region
    _
  $region13: #{gcn_forward.3} parent=0 // pred_fallthru
    _
  %p14 = scmp.eq.s32.totalorder 0, 0
  // Predicated region
  $region14: #{gcn_forward.3} parent=0 // pred_check
    %p15 = pneg %p14
  $region15: #{gcn_forward.3} parent=0 // pred_check_branch
    %17 = sbr.rel (%p15) target = $region17
  $region16: #{gcn_forward.3} parent=0 // pred_region
    %18 = vst [vmem:[%s3] sm:$0xff] 0.0
    %19 = vst [vmem:[%s3 + $0x8] sm:$0xff] 0.0
    %20 = vst [vmem:[%s3 + $0x10] sm:$0xff] 0.0
    %21 = vst [vmem:[%s3 + $0x18] sm:$0xff] 0.0
    %22 = vst [vmem:[%s3 + $0x20] sm:$0xff] 0.0
    %23 = vst [vmem:[%s3 + $0x28] sm:$0xff] 0.0
    %24 = vst [vmem:[%s3 + $0x30] sm:$0xff] 0.0
    %25 = vst [vmem:[%s3 + $0x38] sm:$0xff] 0.0
    %26 = vst [vmem:[%s3 + $0x40] sm:$0xff] 0.0
    %27 = vst [vmem:[%s3 + $0x48] sm:$0xff] 0.0
    %28 = vst [vmem:[%s3 + $0x50] sm:$0xff] 0.0
    %29 = vst [vmem:[%s3 + $0x58] sm:$0xff] 0.0
    %30 = vst [vmem:[%s3 + $0x60] sm:$0xff] 0.0
    %31 = vst [vmem:[%s3 + $0x68] sm:$0xff] 0.0
    %32 = vst [vmem:[%s3 + $0x70] sm:$0xff] 0.0
    %33 = vst [vmem:[%s3 + $0x78] sm:$0xff] 0.0
    %v34 = vld [vmem:[%s1] sm:$0xff]
    %v35 = vld [vmem:[%s1 + $0x8] sm:$0xff]
    %v36 = vld [vmem:[%s1 + $0x10] sm:$0xff]
    %v37 = vld [vmem:[%s1 + $0x18] sm:$0xff]
    %v38 = vld [vmem:[%s1 + $0x20] sm:$0xff]
    %v39 = vld [vmem:[%s1 + $0x28] sm:$0xff]
    %v40 = vld [vmem:[%s1 + $0x30] sm:$0xff]
    %v41 = vld [vmem:[%s1 + $0x38] sm:$0xff]
    %v42 = vld [vmem:[%s1 + $0x40] sm:$0xff]
    %v43 = vld [vmem:[%s1 + $0x48] sm:$0xff]
    %v44 = vld [vmem:[%s1 + $0x50] sm:$0xff]
    %v45 = vld [vmem:[%s1 + $0x58] sm:$0xff]
    %v46 = vld [vmem:[%s1 + $0x60] sm:$0xff]
    %v47 = vld [vmem:[%s1 + $0x68] sm:$0xff]
    %v48 = vld [vmem:[%s1 + $0x70] sm:$0xff]
    %v49 = vld [vmem:[%s1 + $0x78] sm:$0xff]
    %v50 = vld [vmem:[%s2] sm:$0xff]
    %v51 = vld [vmem:[%s2 + $0x8] sm:$0xff]
    %v52 = vld [vmem:[%s2 + $0x10] sm:$0xff]
    %v53 = vld [vmem:[%s2 + $0x18] sm:$0xff]
    %v54 = vld [vmem:[%s2 + $0x20] sm:$0xff]
    %v55 = vld [vmem:[%s2 + $0x28] sm:$0xff]
    %v56 = vld [vmem:[%s2 + $0x30] sm:$0xff]
    %v57 = vld [vmem:[%s2 + $0x38] sm:$0xff]
    %v58 = vld [vmem:[%s2 + $0x40] sm:$0xff]
    %v59 = vld [vmem:[%s2 + $0x48] sm:$0xff]
    %v60 = vld [vmem:[%s2 + $0x50] sm:$0xff]
    %v61 = vld [vmem:[%s2 + $0x58] sm:$0xff]
    %v62 = vld [vmem:[%s2 + $0x60] sm:$0xff]
    %v63 = vld [vmem:[%s2 + $0x68] sm:$0xff]
    %v64 = vld [vmem:[%s2 + $0x70] sm:$0xff]
    %v65 = vld [vmem:[%s2 + $0x78] sm:$0xff]
    %67 = vset.pattern.permute.xlu0 0
    %68 = vperm.xlu0 %67, %v34
    %v69 = vpop.permute.xlu0 %68
    %72 = vset.pattern.permute.xlu0 0
    %73 = vperm.xlu0 %72, %v35
    %v74 = vpop.permute.xlu0 %73
    %77 = vset.pattern.permute.xlu0 0
    %78 = vperm.xlu0 %77, %v36
    %v79 = vpop.permute.xlu0 %78
    %82 = vset.pattern.permute.xlu0 0
    %83 = vperm.xlu0 %82, %v37
    %v84 = vpop.permute.xlu0 %83
    %87 = vset.pattern.permute.xlu0 0
    %88 = vperm.xlu0 %87, %v38
    %v89 = vpop.permute.xlu0 %88
    %92 = vset.pattern.permute.xlu0 0
    %93 = vperm.xlu0 %92, %v39
    %v94 = vpop.permute.xlu0 %93
    %97 = vset.pattern.permute.xlu0 0
    %98 = vperm.xlu0 %97, %v40
    %v99 = vpop.permute.xlu0 %98
    %102 = vset.pattern.permute.xlu0 0
    %103 = vperm.xlu0 %102, %v41
    %v104 = vpop.permute.xlu0 %103
    %107 = vset.pattern.permute.xlu0 0
    %108 = vperm.xlu0 %107, %v42
    %v109 = vpop.permute.xlu0 %108
    %112 = vset.pattern.permute.xlu0 0
    %113 = vperm.xlu0 %112, %v43
    %v114 = vpop.permute.xlu0 %113
    %117 = vset.pattern.permute.xlu0 0
    %118 = vperm.xlu0 %117, %v44
    %v119 = vpop.permute.xlu0 %118
    %122 = vset.pattern.permute.xlu0 0
    %123 = vperm.xlu0 %122, %v45
    %v124 = vpop.permute.xlu0 %123
    %127 = vset.pattern.permute.xlu0 0
    %128 = vperm.xlu0 %127, %v46
    %v129 = vpop.permute.xlu0 %128
    %132 = vset.pattern.permute.xlu0 0
    %133 = vperm.xlu0 %132, %v47
    %v134 = vpop.permute.xlu0 %133
    %137 = vset.pattern.permute.xlu0 0
    %138 = vperm.xlu0 %137, %v48
    %v139 = vpop.permute.xlu0 %138
    %142 = vset.pattern.permute.xlu0 0
    %143 = vperm.xlu0 %142, %v49
    %v144 = vpop.permute.xlu0 %143
    %v146 = vmul.f32 %v69, %v50
    %v147 = vmul.f32 %v74, %v51
    %v148 = vmul.f32 %v79, %v52
    %v149 = vmul.f32 %v84, %v53
    %v150 = vmul.f32 %v89, %v54
    %v151 = vmul.f32 %v94, %v55
    %v152 = vmul.f32 %v99, %v56
    %v153 = vmul.f32 %v104, %v57
    %v154 = vmul.f32 %v109, %v58
    %v155 = vmul.f32 %v114, %v59
    %v156 = vmul.f32 %v119, %v60
    %v157 = vmul.f32 %v124, %v61
    %v158 = vmul.f32 %v129, %v62
    %v159 = vmul.f32 %v134, %v63
    %v160 = vmul.f32 %v139, %v64
    %v161 = vmul.f32 %v144, %v65
    %v162 = vpack.c.bf16 %v146, %v146
    %v163 = vpack.c.bf16 %v147, %v147
    %v164 = vpack.c.bf16 %v148, %v148
    %v165 = vpack.c.bf16 %v149, %v149
    %v166 = vpack.c.bf16 %v150, %v150
    %v167 = vpack.c.bf16 %v151, %v151
    %v168 = vpack.c.bf16 %v152, %v152
    %v169 = vpack.c.bf16 %v153, %v153
    %v170 = vpack.c.bf16 %v154, %v154
    %v171 = vpack.c.bf16 %v155, %v155
    %v172 = vpack.c.bf16 %v156, %v156
    %v173 = vpack.c.bf16 %v157, %v157
    %v174 = vpack.c.bf16 %v158, %v158
    %v175 = vpack.c.bf16 %v159, %v159
    %v176 = vpack.c.bf16 %v160, %v160
    %v177 = vpack.c.bf16 %v161, %v161
    %178 = vst [vmem:[#allocation2] sm:$0xf] %v162
    %179 = vst [vmem:[#allocation2 + $0x4] sm:$0xf] %v163
    %180 = vst [vmem:[#allocation2 + $0x8] sm:$0xf] %v164
    %181 = vst [vmem:[#allocation2 + $0xc] sm:$0xf] %v165
    %182 = vst [vmem:[#allocation2 + $0x10] sm:$0xf] %v166
    %183 = vst [vmem:[#allocation2 + $0x14] sm:$0xf] %v167
    %184 = vst [vmem:[#allocation2 + $0x18] sm:$0xf] %v168
    %185 = vst [vmem:[#allocation2 + $0x1c] sm:$0xf] %v169
    %186 = vst [vmem:[#allocation2 + $0x20] sm:$0xf] %v170
    %187 = vst [vmem:[#allocation2 + $0x24] sm:$0xf] %v171
    %188 = vst [vmem:[#allocation2 + $0x28] sm:$0xf] %v172
    %189 = vst [vmem:[#allocation2 + $0x2c] sm:$0xf] %v173
    %190 = vst [vmem:[#allocation2 + $0x30] sm:$0xf] %v174
    %191 = vst [vmem:[#allocation2 + $0x34] sm:$0xf] %v175
    %192 = vst [vmem:[#allocation2 + $0x38] sm:$0xf] %v176
    %193 = vst [vmem:[#allocation2 + $0x3c] sm:$0xf] %v177
  $region17: #{gcn_forward.3} parent=0 // pred_fallthru
    _
  %v194 = vld [vmem:[%s0] sm:$0x1]
  %v195 = vld [vmem:[%s0 + $0x1] sm:$0x1]
  %v196 = vlaneseq
  %v197 = vshrl.u32 %v196, 7
  %v198 = vadd.s32 %v197, 8
  %v199 = vadd.s32 %v197, 16
  %v200 = vadd.s32 %v197, 24
  %v201 = vadd.s32 %v197, 32
  %v202 = vadd.s32 %v197, 40
  %v203 = vadd.s32 %v197, 48
  %v204 = vadd.s32 %v197, 56
  %v205 = vadd.s32 %v197, 64
  %v206 = vadd.s32 %v197, 72
  %v207 = vadd.s32 %v197, 80
  %v208 = vadd.s32 %v197, 88
  %v209 = vadd.s32 %v197, 96
  %v210 = vadd.s32 %v197, 104
  %v211 = vadd.s32 %v197, 112
  %v212 = vadd.s32 %v197, 120
  %v213 = vperm.slane %v195, 0
  %vm214 = vcmp.eq.s32.totalorder %v213, %v197
  %vm215 = vcmp.eq.s32.totalorder %v213, %v198
  %vm216 = vcmp.eq.s32.totalorder %v213, %v199
  %vm217 = vcmp.eq.s32.totalorder %v213, %v200
  %vm218 = vcmp.eq.s32.totalorder %v213, %v201
  %vm219 = vcmp.eq.s32.totalorder %v213, %v202
  %vm220 = vcmp.eq.s32.totalorder %v213, %v203
  %vm221 = vcmp.eq.s32.totalorder %v213, %v204
  %vm222 = vcmp.eq.s32.totalorder %v213, %v205
  %vm223 = vcmp.eq.s32.totalorder %v213, %v206
  %vm224 = vcmp.eq.s32.totalorder %v213, %v207
  %vm225 = vcmp.eq.s32.totalorder %v213, %v208
  %vm226 = vcmp.eq.s32.totalorder %v213, %v209
  %vm227 = vcmp.eq.s32.totalorder %v213, %v210
  %vm228 = vcmp.eq.s32.totalorder %v213, %v211
  %vm229 = vcmp.eq.s32.totalorder %v213, %v212
  %v230 = vsel %vm214, 1, 0
  %v231 = vsel %vm215, 1, 0
  %v232 = vsel %vm216, 1, 0
  %v233 = vsel %vm217, 1, 0
  %v234 = vsel %vm218, 1, 0
  %v235 = vsel %vm219, 1, 0
  %v236 = vsel %vm220, 1, 0
  %v237 = vsel %vm221, 1, 0
  %v238 = vsel %vm222, 1, 0
  %v239 = vsel %vm223, 1, 0
  %v240 = vsel %vm224, 1, 0
  %v241 = vsel %vm225, 1, 0
  %v242 = vsel %vm226, 1, 0
  %v243 = vsel %vm227, 1, 0
  %v244 = vsel %vm228, 1, 0
  %v245 = vsel %vm229, 1, 0
  %v246 = vcvt.s32.f32 %v230
  %v247 = vcvt.s32.f32 %v231
  %v248 = vcvt.s32.f32 %v232
  %v249 = vcvt.s32.f32 %v233
  %v250 = vcvt.s32.f32 %v234
  %v251 = vcvt.s32.f32 %v235
  %v252 = vcvt.s32.f32 %v236
  %v253 = vcvt.s32.f32 %v237
  %v254 = vcvt.s32.f32 %v238
  %v255 = vcvt.s32.f32 %v239
  %v256 = vcvt.s32.f32 %v240
  %v257 = vcvt.s32.f32 %v241
  %v258 = vcvt.s32.f32 %v242
  %v259 = vcvt.s32.f32 %v243
  %v260 = vcvt.s32.f32 %v244
  %v261 = vcvt.s32.f32 %v245
  %v262 = vpack.c.bf16 %v247, %v246
  %v263 = vpack.c.bf16 %v249, %v248
  %v264 = vpack.c.bf16 %v251, %v250
  %v265 = vpack.c.bf16 %v253, %v252
  %v266 = vpack.c.bf16 %v255, %v254
  %v267 = vpack.c.bf16 %v257, %v256
  %v268 = vpack.c.bf16 %v259, %v258
  %v269 = vpack.c.bf16 %v261, %v260
  %v270 = vperm.slane %v194, 0
  %vm271 = vcmp.eq.s32.totalorder %v270, %v197
  %vm272 = vcmp.eq.s32.totalorder %v270, %v198
  %vm273 = vcmp.eq.s32.totalorder %v270, %v199
  %vm274 = vcmp.eq.s32.totalorder %v270, %v200
  %vm275 = vcmp.eq.s32.totalorder %v270, %v201
  %vm276 = vcmp.eq.s32.totalorder %v270, %v202
  %vm277 = vcmp.eq.s32.totalorder %v270, %v203
  %vm278 = vcmp.eq.s32.totalorder %v270, %v204
  %vm279 = vcmp.eq.s32.totalorder %v270, %v205
  %vm280 = vcmp.eq.s32.totalorder %v270, %v206
  %vm281 = vcmp.eq.s32.totalorder %v270, %v207
  %vm282 = vcmp.eq.s32.totalorder %v270, %v208
  %vm283 = vcmp.eq.s32.totalorder %v270, %v209
  %vm284 = vcmp.eq.s32.totalorder %v270, %v210
  %vm285 = vcmp.eq.s32.totalorder %v270, %v211
  %vm286 = vcmp.eq.s32.totalorder %v270, %v212
  %v287 = vsel %vm271, 1, 0
  %v288 = vsel %vm272, 1, 0
  %v289 = vsel %vm273, 1, 0
  %v290 = vsel %vm274, 1, 0
  %v291 = vsel %vm275, 1, 0
  %v292 = vsel %vm276, 1, 0
  %v293 = vsel %vm277, 1, 0
  %v294 = vsel %vm278, 1, 0
  %v295 = vsel %vm279, 1, 0
  %v296 = vsel %vm280, 1, 0
  %v297 = vsel %vm281, 1, 0
  %v298 = vsel %vm282, 1, 0
  %v299 = vsel %vm283, 1, 0
  %v300 = vsel %vm284, 1, 0
  %v301 = vsel %vm285, 1, 0
  %v302 = vsel %vm286, 1, 0
  %v303 = vcvt.s32.f32 %v287
  %v304 = vcvt.s32.f32 %v288
  %v305 = vcvt.s32.f32 %v289
  %v306 = vcvt.s32.f32 %v290
  %v307 = vcvt.s32.f32 %v291
  %v308 = vcvt.s32.f32 %v292
  %v309 = vcvt.s32.f32 %v293
  %v310 = vcvt.s32.f32 %v294
  %v311 = vcvt.s32.f32 %v295
  %v312 = vcvt.s32.f32 %v296
  %v313 = vcvt.s32.f32 %v297
  %v314 = vcvt.s32.f32 %v298
  %v315 = vcvt.s32.f32 %v299
  %v316 = vcvt.s32.f32 %v300
  %v317 = vcvt.s32.f32 %v301
  %v318 = vcvt.s32.f32 %v302
  %v319 = vpack.c.bf16 %v304, %v303
  %v320 = vpack.c.bf16 %v306, %v305
  %v321 = vpack.c.bf16 %v308, %v307
  %v322 = vpack.c.bf16 %v310, %v309
  %v323 = vpack.c.bf16 %v312, %v311
  %v324 = vpack.c.bf16 %v314, %v313
  %v325 = vpack.c.bf16 %v316, %v315
  %v326 = vpack.c.bf16 %v318, %v317
  %v327 = vld [vmem:[#allocation2] sm:$0xf]
  %v328 = vld [vmem:[#allocation2 + $0x4] sm:$0xf]
  %v329 = vld [vmem:[#allocation2 + $0x8] sm:$0xf]
  %v330 = vld [vmem:[#allocation2 + $0xc] sm:$0xf]
  %v331 = vld [vmem:[#allocation2 + $0x10] sm:$0xf]
  %v332 = vld [vmem:[#allocation2 + $0x14] sm:$0xf]
  %v333 = vld [vmem:[#allocation2 + $0x18] sm:$0xf]
  %v334 = vld [vmem:[#allocation2 + $0x1c] sm:$0xf]
  %v335 = vld [vmem:[#allocation2 + $0x20] sm:$0xf]
  %v336 = vld [vmem:[#allocation2 + $0x24] sm:$0xf]
  %v337 = vld [vmem:[#allocation2 + $0x28] sm:$0xf]
  %v338 = vld [vmem:[#allocation2 + $0x2c] sm:$0xf]
  %v339 = vld [vmem:[#allocation2 + $0x30] sm:$0xf]
  %v340 = vld [vmem:[#allocation2 + $0x34] sm:$0xf]
  %v341 = vld [vmem:[#allocation2 + $0x38] sm:$0xf]
  %v342 = vld [vmem:[#allocation2 + $0x3c] sm:$0xf]
  %343 = vxpose.xlu0.c.b16.start [1/8] %v319, 128
  %344 = vxpose.xlu0.c.b16.cont [2/8] %v320, 128
  %345 = vxpose.xlu0.c.b16.cont [3/8] %v321, 128
  %346 = vxpose.xlu0.c.b16.cont [4/8] %v322, 128
  %347 = vxpose.xlu0.c.b16.cont [5/8] %v323, 128
  %348 = vxpose.xlu0.c.b16.cont [6/8] %v324, 128
  %349 = vxpose.xlu0.c.b16.cont [7/8] %v325, 128
  %350 = vxpose.xlu0.c.b16.end [8/8] %v326, 128
  %v351 = vpop.trf.xlu0
  %v352 = vpop.trf.xlu0
  %v353 = vpop.trf.xlu0
  %v354 = vpop.trf.xlu0
  %v355 = vpop.trf.xlu0
  %v356 = vpop.trf.xlu0
  %v357 = vpop.trf.xlu0
  %v358 = vpop.trf.xlu0
  %v375 = vunpack.c.l.b16 %v327
  %v376 = vunpack.c.l.b16 %v328
  %v377 = vunpack.c.l.b16 %v329
  %v378 = vunpack.c.l.b16 %v330
  %v379 = vunpack.c.l.b16 %v331
  %v380 = vunpack.c.l.b16 %v332
  %v381 = vunpack.c.l.b16 %v333
  %v382 = vunpack.c.l.b16 %v334
  %v383 = vunpack.c.l.b16 %v335
  %v384 = vunpack.c.l.b16 %v336
  %v385 = vunpack.c.l.b16 %v337
  %v386 = vunpack.c.l.b16 %v338
  %v387 = vunpack.c.l.b16 %v339
  %v388 = vunpack.c.l.b16 %v340
  %v389 = vunpack.c.l.b16 %v341
  %v390 = vunpack.c.l.b16 %v342
  %v391 = vpack.c.b16 %v376, %v375
  %v392 = vpack.c.b16 %v378, %v377
  %v393 = vpack.c.b16 %v380, %v379
  %v394 = vpack.c.b16 %v382, %v381
  %v395 = vpack.c.b16 %v384, %v383
  %v396 = vpack.c.b16 %v386, %v385
  %v397 = vpack.c.b16 %v388, %v387
  %v398 = vpack.c.b16 %v390, %v389
  %407 = vmatpush.bf16.msra.mxu0 %v398
  %408 = vmatpush.bf16.msra.mxu0 %v397
  %409 = vmatpush.bf16.msra.mxu0 %v396
  %410 = vmatpush.bf16.msra.mxu0 %v395
  %411 = vmatpush.bf16.msra.mxu0 %v394
  %412 = vmatpush.bf16.msra.mxu0 %v393
  %413 = vmatpush.bf16.msra.mxu0 %v392
  %414 = vmatpush.bf16.msra.mxu0 %v391
  %415 = vmatmul.bf16.gmra.mxu0 %v351
  %v416 = vpop.f32.mrf.mxu0
  %v417 = vadd.f32 0.0, %v416
  %v418 = vpop.f32.mrf.mxu0
  %v419 = vadd.f32 0.0, %v418
  %420 = vmatmul.bf16.gmra.mxu0 %v352
  %v421 = vpop.f32.mrf.mxu0
  %v422 = vadd.f32 0.0, %v421
  %v423 = vpop.f32.mrf.mxu0
  %v424 = vadd.f32 0.0, %v423
  %425 = vmatmul.bf16.gmra.mxu0 %v353
  %v426 = vpop.f32.mrf.mxu0
  %v427 = vadd.f32 0.0, %v426
  %v428 = vpop.f32.mrf.mxu0
  %v429 = vadd.f32 0.0, %v428
  %430 = vmatmul.bf16.gmra.mxu0 %v354
  %v431 = vpop.f32.mrf.mxu0
  %v432 = vadd.f32 0.0, %v431
  %v433 = vpop.f32.mrf.mxu0
  %v434 = vadd.f32 0.0, %v433
  %435 = vmatmul.bf16.gmra.mxu0 %v355
  %v436 = vpop.f32.mrf.mxu0
  %v437 = vadd.f32 0.0, %v436
  %v438 = vpop.f32.mrf.mxu0
  %v439 = vadd.f32 0.0, %v438
  %440 = vmatmul.bf16.gmra.mxu0 %v356
  %v441 = vpop.f32.mrf.mxu0
  %v442 = vadd.f32 0.0, %v441
  %v443 = vpop.f32.mrf.mxu0
  %v444 = vadd.f32 0.0, %v443
  %445 = vmatmul.bf16.gmra.mxu0 %v357
  %v446 = vpop.f32.mrf.mxu0
  %v447 = vadd.f32 0.0, %v446
  %v448 = vpop.f32.mrf.mxu0
  %v449 = vadd.f32 0.0, %v448
  %450 = vmatmul.bf16.gmra.mxu0 %v358
  %v451 = vpop.f32.mrf.mxu0
  %v452 = vadd.f32 0.0, %v451
  %v453 = vpop.f32.mrf.mxu0
  %v454 = vadd.f32 0.0, %v453
  %455 = vdwg.mxu0
  %v456 = vld [vmem:[%s3] sm:$0xff]
  %v457 = vld [vmem:[%s3 + $0x8] sm:$0xff]
  %v458 = vld [vmem:[%s3 + $0x10] sm:$0xff]
  %v459 = vld [vmem:[%s3 + $0x18] sm:$0xff]
  %v460 = vld [vmem:[%s3 + $0x20] sm:$0xff]
  %v461 = vld [vmem:[%s3 + $0x28] sm:$0xff]
  %v462 = vld [vmem:[%s3 + $0x30] sm:$0xff]
  %v463 = vld [vmem:[%s3 + $0x38] sm:$0xff]
  %v464 = vld [vmem:[%s3 + $0x40] sm:$0xff]
  %v465 = vld [vmem:[%s3 + $0x48] sm:$0xff]
  %v466 = vld [vmem:[%s3 + $0x50] sm:$0xff]
  %v467 = vld [vmem:[%s3 + $0x58] sm:$0xff]
  %v468 = vld [vmem:[%s3 + $0x60] sm:$0xff]
  %v469 = vld [vmem:[%s3 + $0x68] sm:$0xff]
  %v470 = vld [vmem:[%s3 + $0x70] sm:$0xff]
  %v471 = vld [vmem:[%s3 + $0x78] sm:$0xff]
  %v472 = vpack.c.bf16 %v419, %v417
  %v473 = vpack.c.bf16 %v424, %v422
  %v474 = vpack.c.bf16 %v429, %v427
  %v475 = vpack.c.bf16 %v434, %v432
  %v476 = vpack.c.bf16 %v439, %v437
  %v477 = vpack.c.bf16 %v444, %v442
  %v478 = vpack.c.bf16 %v449, %v447
  %v479 = vpack.c.bf16 %v454, %v452
  %480 = vmatpush.bf16.msra.mxu0 %v479
  %481 = vmatpush.bf16.msra.mxu0 %v478
  %482 = vmatpush.bf16.msra.mxu0 %v477
  %483 = vmatpush.bf16.msra.mxu0 %v476
  %484 = vmatpush.bf16.msra.mxu0 %v475
  %485 = vmatpush.bf16.msra.mxu0 %v474
  %486 = vmatpush.bf16.msra.mxu0 %v473
  %487 = vmatpush.bf16.msra.mxu0 %v472
  %488 = vmatmul.bf16.gmra.mxu0 %v262
  %v489 = vpop.f32.mrf.mxu0
  %v490 = vadd.f32 0.0, %v489
  %v491 = vpop.f32.mrf.mxu0
  %v492 = vadd.f32 0.0, %v491
  %493 = vmatmul.bf16.gmra.mxu0 %v263
  %v494 = vpop.f32.mrf.mxu0
  %v495 = vadd.f32 0.0, %v494
  %v496 = vpop.f32.mrf.mxu0
  %v497 = vadd.f32 0.0, %v496
  %498 = vmatmul.bf16.gmra.mxu0 %v264
  %v499 = vpop.f32.mrf.mxu0
  %v500 = vadd.f32 0.0, %v499
  %v501 = vpop.f32.mrf.mxu0
  %v502 = vadd.f32 0.0, %v501
  %503 = vmatmul.bf16.gmra.mxu0 %v265
  %v504 = vpop.f32.mrf.mxu0
  %v505 = vadd.f32 0.0, %v504
  %v506 = vpop.f32.mrf.mxu0
  %v507 = vadd.f32 0.0, %v506
  %508 = vmatmul.bf16.gmra.mxu0 %v266
  %v509 = vpop.f32.mrf.mxu0
  %v510 = vadd.f32 0.0, %v509
  %v511 = vpop.f32.mrf.mxu0
  %v512 = vadd.f32 0.0, %v511
  %513 = vmatmul.bf16.gmra.mxu0 %v267
  %v514 = vpop.f32.mrf.mxu0
  %v515 = vadd.f32 0.0, %v514
  %v516 = vpop.f32.mrf.mxu0
  %v517 = vadd.f32 0.0, %v516
  %518 = vmatmul.bf16.gmra.mxu0 %v268
  %v519 = vpop.f32.mrf.mxu0
  %v520 = vadd.f32 0.0, %v519
  %v521 = vpop.f32.mrf.mxu0
  %v522 = vadd.f32 0.0, %v521
  %523 = vmatmul.bf16.gmra.mxu0 %v269
  %v524 = vpop.f32.mrf.mxu0
  %v525 = vadd.f32 0.0, %v524
  %v526 = vpop.f32.mrf.mxu0
  %v527 = vadd.f32 0.0, %v526
  %528 = vdwg.mxu0
  %v529 = vadd.f32 %v456, %v490
  %v530 = vadd.f32 %v457, %v492
  %v531 = vadd.f32 %v458, %v495
  %v532 = vadd.f32 %v459, %v497
  %v533 = vadd.f32 %v460, %v500
  %v534 = vadd.f32 %v461, %v502
  %v535 = vadd.f32 %v462, %v505
  %v536 = vadd.f32 %v463, %v507
  %v537 = vadd.f32 %v464, %v510
  %v538 = vadd.f32 %v465, %v512
  %v539 = vadd.f32 %v466, %v515
  %v540 = vadd.f32 %v467, %v517
  %v541 = vadd.f32 %v468, %v520
  %v542 = vadd.f32 %v469, %v522
  %v543 = vadd.f32 %v470, %v525
  %v544 = vadd.f32 %v471, %v527
  %545 = vst [vmem:[%s3] sm:$0xff] %v529
  %546 = vst [vmem:[%s3 + $0x8] sm:$0xff] %v530
  %547 = vst [vmem:[%s3 + $0x10] sm:$0xff] %v531
  %548 = vst [vmem:[%s3 + $0x18] sm:$0xff] %v532
  %549 = vst [vmem:[%s3 + $0x20] sm:$0xff] %v533
  %550 = vst [vmem:[%s3 + $0x28] sm:$0xff] %v534
  %551 = vst [vmem:[%s3 + $0x30] sm:$0xff] %v535
  %552 = vst [vmem:[%s3 + $0x38] sm:$0xff] %v536
  %553 = vst [vmem:[%s3 + $0x40] sm:$0xff] %v537
  %554 = vst [vmem:[%s3 + $0x48] sm:$0xff] %v538
  %555 = vst [vmem:[%s3 + $0x50] sm:$0xff] %v539
  %556 = vst [vmem:[%s3 + $0x58] sm:$0xff] %v540
  %557 = vst [vmem:[%s3 + $0x60] sm:$0xff] %v541
  %558 = vst [vmem:[%s3 + $0x68] sm:$0xff] %v542
  %559 = vst [vmem:[%s3 + $0x70] sm:$0xff] %v543
  %560 = vst [vmem:[%s3 + $0x78] sm:$0xff] %v544
  // Predicated region
  $region18: #{gcn_forward.3} parent=0 // pred_check
    %p561 = pneg %p14
  $region19: #{gcn_forward.3} parent=0 // pred_check_branch
    %563 = sbr.rel (%p561) target = $region21
  $region20: #{gcn_forward.3} parent=0 // pred_region
    %v564 = vld [vmem:[%s1] sm:$0xff]
    %v565 = vld [vmem:[%s1 + $0x8] sm:$0xff]
    %v566 = vld [vmem:[%s1 + $0x10] sm:$0xff]
    %v567 = vld [vmem:[%s1 + $0x18] sm:$0xff]
    %v568 = vld [vmem:[%s1 + $0x20] sm:$0xff]
    %v569 = vld [vmem:[%s1 + $0x28] sm:$0xff]
    %v570 = vld [vmem:[%s1 + $0x30] sm:$0xff]
    %v571 = vld [vmem:[%s1 + $0x38] sm:$0xff]
    %v572 = vld [vmem:[%s1 + $0x40] sm:$0xff]
    %v573 = vld [vmem:[%s1 + $0x48] sm:$0xff]
    %v574 = vld [vmem:[%s1 + $0x50] sm:$0xff]
    %v575 = vld [vmem:[%s1 + $0x58] sm:$0xff]
    %v576 = vld [vmem:[%s1 + $0x60] sm:$0xff]
    %v577 = vld [vmem:[%s1 + $0x68] sm:$0xff]
    %v578 = vld [vmem:[%s1 + $0x70] sm:$0xff]
    %v579 = vld [vmem:[%s1 + $0x78] sm:$0xff]
    %v580 = vld [vmem:[%s3] sm:$0xff]
    %v581 = vld [vmem:[%s3 + $0x8] sm:$0xff]
    %v582 = vld [vmem:[%s3 + $0x10] sm:$0xff]
    %v583 = vld [vmem:[%s3 + $0x18] sm:$0xff]
    %v584 = vld [vmem:[%s3 + $0x20] sm:$0xff]
    %v585 = vld [vmem:[%s3 + $0x28] sm:$0xff]
    %v586 = vld [vmem:[%s3 + $0x30] sm:$0xff]
    %v587 = vld [vmem:[%s3 + $0x38] sm:$0xff]
    %v588 = vld [vmem:[%s3 + $0x40] sm:$0xff]
    %v589 = vld [vmem:[%s3 + $0x48] sm:$0xff]
    %v590 = vld [vmem:[%s3 + $0x50] sm:$0xff]
    %v591 = vld [vmem:[%s3 + $0x58] sm:$0xff]
    %v592 = vld [vmem:[%s3 + $0x60] sm:$0xff]
    %v593 = vld [vmem:[%s3 + $0x68] sm:$0xff]
    %v594 = vld [vmem:[%s3 + $0x70] sm:$0xff]
    %v595 = vld [vmem:[%s3 + $0x78] sm:$0xff]
    %597 = vset.pattern.permute.xlu0 0
    %598 = vperm.xlu0 %597, %v564
    %v599 = vpop.permute.xlu0 %598
    %602 = vset.pattern.permute.xlu0 0
    %603 = vperm.xlu0 %602, %v565
    %v604 = vpop.permute.xlu0 %603
    %607 = vset.pattern.permute.xlu0 0
    %608 = vperm.xlu0 %607, %v566
    %v609 = vpop.permute.xlu0 %608
    %612 = vset.pattern.permute.xlu0 0
    %613 = vperm.xlu0 %612, %v567
    %v614 = vpop.permute.xlu0 %613
    %617 = vset.pattern.permute.xlu0 0
    %618 = vperm.xlu0 %617, %v568
    %v619 = vpop.permute.xlu0 %618
    %622 = vset.pattern.permute.xlu0 0
    %623 = vperm.xlu0 %622, %v569
    %v624 = vpop.permute.xlu0 %623
    %627 = vset.pattern.permute.xlu0 0
    %628 = vperm.xlu0 %627, %v570
    %v629 = vpop.permute.xlu0 %628
    %632 = vset.pattern.permute.xlu0 0
    %633 = vperm.xlu0 %632, %v571
    %v634 = vpop.permute.xlu0 %633
    %637 = vset.pattern.permute.xlu0 0
    %638 = vperm.xlu0 %637, %v572
    %v639 = vpop.permute.xlu0 %638
    %642 = vset.pattern.permute.xlu0 0
    %643 = vperm.xlu0 %642, %v573
    %v644 = vpop.permute.xlu0 %643
    %647 = vset.pattern.permute.xlu0 0
    %648 = vperm.xlu0 %647, %v574
    %v649 = vpop.permute.xlu0 %648
    %652 = vset.pattern.permute.xlu0 0
    %653 = vperm.xlu0 %652, %v575
    %v654 = vpop.permute.xlu0 %653
    %657 = vset.pattern.permute.xlu0 0
    %658 = vperm.xlu0 %657, %v576
    %v659 = vpop.permute.xlu0 %658
    %662 = vset.pattern.permute.xlu0 0
    %663 = vperm.xlu0 %662, %v577
    %v664 = vpop.permute.xlu0 %663
    %667 = vset.pattern.permute.xlu0 0
    %668 = vperm.xlu0 %667, %v578
    %v669 = vpop.permute.xlu0 %668
    %672 = vset.pattern.permute.xlu0 0
    %673 = vperm.xlu0 %672, %v579
    %v674 = vpop.permute.xlu0 %673
    %v676 = vmul.f32 %v599, %v580
    %v677 = vmul.f32 %v604, %v581
    %v678 = vmul.f32 %v609, %v582
    %v679 = vmul.f32 %v614, %v583
    %v680 = vmul.f32 %v619, %v584
    %v681 = vmul.f32 %v624, %v585
    %v682 = vmul.f32 %v629, %v586
    %v683 = vmul.f32 %v634, %v587
    %v684 = vmul.f32 %v639, %v588
    %v685 = vmul.f32 %v644, %v589
    %v686 = vmul.f32 %v649, %v590
    %v687 = vmul.f32 %v654, %v591
    %v688 = vmul.f32 %v659, %v592
    %v689 = vmul.f32 %v664, %v593
    %v690 = vmul.f32 %v669, %v594
    %v691 = vmul.f32 %v674, %v595
    %v692 = vmax.f32 %v676, 0.0
    %v693 = vmax.f32 %v677, 0.0
    %v694 = vmax.f32 %v678, 0.0
    %v695 = vmax.f32 %v679, 0.0
    %v696 = vmax.f32 %v680, 0.0
    %v697 = vmax.f32 %v681, 0.0
    %v698 = vmax.f32 %v682, 0.0
    %v699 = vmax.f32 %v683, 0.0
    %v700 = vmax.f32 %v684, 0.0
    %v701 = vmax.f32 %v685, 0.0
    %v702 = vmax.f32 %v686, 0.0
    %v703 = vmax.f32 %v687, 0.0
    %v704 = vmax.f32 %v688, 0.0
    %v705 = vmax.f32 %v689, 0.0
    %v706 = vmax.f32 %v690, 0.0
    %v707 = vmax.f32 %v691, 0.0
    %708 = vst [vmem:[%s3] sm:$0xff] %v692
    %709 = vst [vmem:[%s3 + $0x8] sm:$0xff] %v693
    %710 = vst [vmem:[%s3 + $0x10] sm:$0xff] %v694
    %711 = vst [vmem:[%s3 + $0x18] sm:$0xff] %v695
    %712 = vst [vmem:[%s3 + $0x20] sm:$0xff] %v696
    %713 = vst [vmem:[%s3 + $0x28] sm:$0xff] %v697
    %714 = vst [vmem:[%s3 + $0x30] sm:$0xff] %v698
    %715 = vst [vmem:[%s3 + $0x38] sm:$0xff] %v699
    %716 = vst [vmem:[%s3 + $0x40] sm:$0xff] %v700
    %717 = vst [vmem:[%s3 + $0x48] sm:$0xff] %v701
    %718 = vst [vmem:[%s3 + $0x50] sm:$0xff] %v702
    %719 = vst [vmem:[%s3 + $0x58] sm:$0xff] %v703
    %720 = vst [vmem:[%s3 + $0x60] sm:$0xff] %v704
    %721 = vst [vmem:[%s3 + $0x68] sm:$0xff] %v705
    %722 = vst [vmem:[%s3 + $0x70] sm:$0xff] %v706
    %723 = vst [vmem:[%s3 + $0x78] sm:$0xff] %v707
  $region21: #{gcn_forward.3} parent=0 // pred_fallthru
    _
  // Predicated region
  $region22: #{gcn_forward.3} parent=0 // pred_check
    _
  $region23: #{gcn_forward.3} parent=0 // pred_check_branch
    %725 = sbr.rel (0) target = $region25
  $region24: #{gcn_forward.3} parent=0 // pred_region
    _
  $region25: #{gcn_forward.3} parent=0 // pred_fallthru
    _
  // Predicated region
  $region26: #{gcn_forward.3} parent=0 // pred_check
    _
  $region27: #{gcn_forward.3} parent=0 // pred_check_branch
    %727 = sbr.rel (0) target = $region29
  $region28: #{gcn_forward.3} parent=0 // pred_region
    _
  $region29: #{gcn_forward.3} parent=0 // pred_fallthru
    _

</llo_original>
